<compile_context>
chip_gen: v6e
topology: v6e:2x2x1
jax: 0.10.0
libtpu: 0.0.40
codegen_flags: <defaults>
</compile_context>

<pallas_src>
import jax
import jax.numpy as jnp
from jax.experimental import pallas as pl
from jax.experimental.pallas import tpu as pltpu

SCALE = 6.0        # self.scale
OUTPUT_NUM = 1     # output_num == 1 branch (scale * sigmoid)

FEAT_DIM = 128     # padded hidden/lane width
IN_DIM = 512       # backbone feature width
TM_MAX = 1024      # max batch-tile rows

# Row offsets of each (padded) weight inside the weight slab.
_W_RED = (0, 512)      # (512,  20) -> rows   0:512
_W_FC1 = (512, 640)    # ( 20, 100) -> rows 512:640
_W_FC2 = (640, 768)    # (100,  50) -> rows 640:768
_W_FC3 = (768, 896)    # ( 50,  20) -> rows 768:896
W_SLAB_ROWS = 896


def _mlp_head_kernel(feat_ref, w_ref, bias_ref, out_ref):
    """Fused MLP head on one (TM, 512) batch tile.

    feat_ref : (TM, 512)   f32   raw backbone feature rows (cast to bf16 here)
    w_ref    : (896, 128)  bf16  concatenated, zero-padded weights
    bias_ref : (8, 128)    f32   rows 0..3 = biases, row 4 = fc4 weight row,
                                 row 5 lane 0 = fc4 bias
    out_ref  : (1, 1, TM)  f32   transposed, lane-dense predictions
    """
    x = feat_ref[...].astype(jnp.bfloat16)                       # (TM, 512)

    # red: 512 -> 128 (20 real lanes)
    h = jnp.dot(x, w_ref[_W_RED[0]:_W_RED[1], :],
                preferred_element_type=jnp.float32)
    h = jnp.maximum(h + bias_ref[0:1, :], 0.0)

    # fc1: 128 -> 128 (100 real lanes)
    h = jnp.dot(h.astype(jnp.bfloat16), w_ref[_W_FC1[0]:_W_FC1[1], :],
                preferred_element_type=jnp.float32)
    h = jnp.maximum(h + bias_ref[1:2, :], 0.0)

    # fc2: 128 -> 128 (50 real lanes)
    h = jnp.dot(h.astype(jnp.bfloat16), w_ref[_W_FC2[0]:_W_FC2[1], :],
                preferred_element_type=jnp.float32)
    h = jnp.maximum(h + bias_ref[2:3, :], 0.0)

    # fc3: 128 -> 128 (20 real lanes)
    h = jnp.dot(h.astype(jnp.bfloat16), w_ref[_W_FC3[0]:_W_FC3[1], :],
                preferred_element_type=jnp.float32)
    h = jnp.maximum(h + bias_ref[3:4, :], 0.0)

    # fc4: 20 -> 1, contracted against h's lane dim so the result is a
    # lane-dense (1, TM) row (same pattern as q @ k.T in attention kernels).
    w4_row = bias_ref[4:5, :].astype(jnp.bfloat16)               # (1, 128)
    logits = jax.lax.dot_general(
        w4_row, h.astype(jnp.bfloat16),
        dimension_numbers=(((1,), (1,)), ((), ())),
        preferred_element_type=jnp.float32)                      # (1, TM)
    logits = logits + bias_ref[5:6, 0:1]                         # + b4 (lane 0 only)

    out_ref[...] = (SCALE * jax.nn.sigmoid(logits))[None]        # (1, 1, TM)


def _round_up(x, m):
    return (x + m - 1) // m * m


def _cdiv(a, b):
    return -(-a // b)


def pack_params(params):
    """Pack the 5 Linear layers into one bf16 weight slab + one f32 bias slab."""
    def pad(w, rows, cols):
        return jnp.zeros((rows, cols), jnp.float32).at[:w.shape[0], :w.shape[1]].set(w)

    w_slab = jnp.concatenate(
        [pad(params["w_red"], 512, FEAT_DIM),
         pad(params["w1"], FEAT_DIM, FEAT_DIM),
         pad(params["w2"], FEAT_DIM, FEAT_DIM),
         pad(params["w3"], FEAT_DIM, FEAT_DIM)],
        axis=0).astype(jnp.bfloat16)                             # (896, 128) bf16

    b_slab = jnp.zeros((8, FEAT_DIM), jnp.float32)
    b_slab = b_slab.at[0, :20].set(params["b_red"][0])
    b_slab = b_slab.at[1, :100].set(params["b1"][0])
    b_slab = b_slab.at[2, :50].set(params["b2"][0])
    b_slab = b_slab.at[3, :20].set(params["b3"][0])
    b_slab = b_slab.at[4, :20].set(params["w4"][:, 0])           # fc4 weight row
    b_slab = b_slab.at[5, 0].set(params["b4"][0, 0])             # fc4 bias, lane 0 only
    return b_slab, w_slab


def prediction_module_head(feat, params):
    """feat: (B, 512) f32 image feature -> (B, 1) f32 prediction."""
    B = feat.shape[0]
    b_slab, w_slab = pack_params(params)

    # Tile the batch: split evenly into >= 2 tiles when B >= 16 (v7x megacore),
    # pad only to a multiple of 8 sublanes per tile.
    num_tiles = _cdiv(B, TM_MAX)
    if B >= 16:
        num_tiles = max(num_tiles, 2)
    tm = _round_up(_cdiv(B, num_tiles), 8)
    b_pad = num_tiles * tm
    if b_pad != B:
        feat = jnp.pad(feat, ((0, b_pad - B), (0, 0)))           # f32, minimal pad

    flops = 2 * B * (512 * 20 + 20 * 100 + 100 * 50 + 50 * 20 + 20)
    bytes_accessed = (b_pad * IN_DIM * 4            # feature read (f32, no pre-copy)
                      + W_SLAB_ROWS * FEAT_DIM * 2  # weight slab (bf16)
                      + 8 * FEAT_DIM * 4            # bias slab (f32)
                      + num_tiles * tm * 4)         # lane-dense f32 output

    out_rows = pl.pallas_call(
        _mlp_head_kernel,
        out_shape=jax.ShapeDtypeStruct((num_tiles, 1, tm), jnp.float32),
        grid=(num_tiles,),
        in_specs=[
            pl.BlockSpec((tm, IN_DIM), lambda i: (i, 0)),            # streamed features
            pl.BlockSpec((W_SLAB_ROWS, FEAT_DIM), lambda i: (0, 0),
                         pipeline_mode=pl.Buffered(buffer_count=1)),  # resident weights
            pl.BlockSpec((8, FEAT_DIM), lambda i: (0, 0),
                         pipeline_mode=pl.Buffered(buffer_count=1)),  # resident biases
        ],
        out_specs=pl.BlockSpec((1, 1, tm), lambda i: (i, 0, 0)),
        compiler_params=pltpu.CompilerParams(
            dimension_semantics=("parallel",)),
        cost_estimate=pl.CostEstimate(
            flops=flops, transcendentals=B, bytes_accessed=bytes_accessed),
    )(feat, w_slab, b_slab)

    return out_rows.reshape(-1)[:B].reshape(B, OUTPUT_NUM)


def init_params(key):
    """Deterministic synthetic params. Linear(in,out): weight (in,out), bias (1,out)."""
    dims = [("red", 512, 20), ("1", 20, 100), ("2", 100, 50),
            ("3", 50, 20), ("4", 20, OUTPUT_NUM)]
    params = {}
    for name, d_in, d_out in dims:
        key, kw, kb = jax.random.split(key, 3)
        bound = 1.0 / jnp.sqrt(d_in)
        wkey = f"w_{name}" if name == "red" else f"w{name}"
        bkey = f"b_{name}" if name == "red" else f"b{name}"
        params[wkey] = jax.random.uniform(kw, (d_in, d_out), jnp.float32, -bound, bound)
        params[bkey] = jax.random.uniform(kb, (1, d_out), jnp.float32, -bound, bound)
    return params


def reference_head(feat, p):
    """Pure-JAX reference mirroring the kernel's bf16-MXU / f32-accumulate compute."""
    bf = jnp.bfloat16
    h = jnp.dot(feat.astype(bf), p["w_red"].astype(bf),
                preferred_element_type=jnp.float32) + p["b_red"]
    h = jnp.maximum(h, 0.0)
    h = jnp.dot(h.astype(bf), p["w1"].astype(bf),
                preferred_element_type=jnp.float32) + p["b1"]
    h = jnp.maximum(h, 0.0)
    h = jnp.dot(h.astype(bf), p["w2"].astype(bf),
                preferred_element_type=jnp.float32) + p["b2"]
    h = jnp.maximum(h, 0.0)
    h = jnp.dot(h.astype(bf), p["w3"].astype(bf),
                preferred_element_type=jnp.float32) + p["b3"]
    h = jnp.maximum(h, 0.0)
    logits = jnp.dot(h.astype(bf), p["w4"].astype(bf),
                     preferred_element_type=jnp.float32) + p["b4"]
    return SCALE * jax.nn.sigmoid(logits)


def reference_head_f32(feat, p):
    """Full-f32 reference of the PyTorch module (loose sanity check only)."""
    h = jnp.maximum(feat @ p["w_red"] + p["b_red"], 0.0)
    h = jnp.maximum(h @ p["w1"] + p["b1"], 0.0)
    h = jnp.maximum(h @ p["w2"] + p["b2"], 0.0)
    h = jnp.maximum(h @ p["w3"] + p["b3"], 0.0)
    logits = h @ p["w4"] + p["b4"]
    return SCALE * jax.nn.sigmoid(logits)


if __name__ == "__main__":
    key = jax.random.PRNGKey(0)
    key, kf = jax.random.split(key)

    B = 4
    # 512-d image feature (output of the external 3D ResNet-18 backbone).
    image_feature = jax.random.normal(kf, (B, IN_DIM), jnp.float32)

    params = init_params(key)

    out = prediction_module_head(image_feature, params)
    out = jax.block_until_ready(out)

    ref = reference_head(image_feature, params)
    assert out.shape == (B, OUTPUT_NUM)
    assert jnp.allclose(out, ref, atol=1e-3, rtol=1e-3), (
        f"max abs err vs bf16-mirrored ref {jnp.max(jnp.abs(out - ref))}")

    # Loose check vs the pure-f32 PyTorch-equivalent math (bf16 MXU operands
    # introduce ~1e-2-level deviation by design).
    ref32 = reference_head_f32(image_feature, params)
    assert jnp.allclose(out, ref32, atol=1e-1), (
        f"max abs err vs f32 ref {jnp.max(jnp.abs(out - ref32))}")

    print("KERNEL_OK")
</pallas_src>

<mosaic_0001>
module attributes {stable_mosaic.version = 11 : i64} {
  func.func @_mlp_head_kernel(%arg0: i32, %arg1: memref<8x512xf32, #tpu.memory_space<vmem>>, %arg2: memref<896x128xbf16, #tpu.memory_space<vmem>>, %arg3: memref<8x128xf32, #tpu.memory_space<vmem>>, %arg4: memref<1x1x8xf32, #tpu.memory_space<vmem>>) attributes {dimension_semantics = [#tpu.dimension_semantics<parallel>], iteration_bounds = array<i64: 1>, scalar_prefetch = 0 : i64, scratch_operands = 0 : i64, tpu.core_type = #tpu.core_type<tc>, window_params = [{transform_indices = @transform_0, window_bounds = array<i64: 8, 512>}, {pipeline_mode = #tpu.pipeline_mode<synchronous>, transform_indices = @transform_1, window_bounds = array<i64: 896, 128>}, {pipeline_mode = #tpu.pipeline_mode<synchronous>, transform_indices = @transform_2, window_bounds = array<i64: 8, 128>}, {transform_indices = @transform_3, window_bounds = array<i64: 1, 1, 8>}]} {
    %c0 = arith.constant 0 : index
    %c0_0 = arith.constant 0 : index
    %0 = vector.load %arg1[%c0, %c0_0] : memref<8x512xf32, #tpu.memory_space<vmem>>, vector<8x512xf32>
    %1 = arith.truncf %0 : vector<8x512xf32> to vector<8x512xbf16>
    %c0_1 = arith.constant 0 : index
    %c0_2 = arith.constant 0 : index
    %2 = vector.load %arg2[%c0_1, %c0_2] : memref<896x128xbf16, #tpu.memory_space<vmem>>, vector<512x128xbf16>
    %cst = arith.constant dense<0.000000e+00> : vector<8x128xf32>
    %3 = tpu.matmul %1, %2, %cst {dimension_numbers = #tpu.dot_dimension_numbers<[1], [0], [0], [1], [0, 0, 1, 1], [], []>} : vector<8x512xbf16>, vector<512x128xbf16>, vector<8x128xf32> -> vector<8x128xf32>
    %c0_3 = arith.constant 0 : index
    %c0_4 = arith.constant 0 : index
    %4 = vector.load %arg3[%c0_3, %c0_4] : memref<8x128xf32, #tpu.memory_space<vmem>>, vector<1x128xf32>
    %5 = vector.broadcast %4 : vector<1x128xf32> to vector<8x128xf32>
    %6 = arith.addf %3, %5 : vector<8x128xf32>
    %cst_5 = arith.constant 0.000000e+00 : f32
    %7 = vector.broadcast %cst_5 : f32 to vector<8x128xf32>
    %8 = arith.maximumf %6, %7 : vector<8x128xf32>
    %9 = arith.truncf %8 : vector<8x128xf32> to vector<8x128xbf16>
    %c512 = arith.constant 512 : index
    %c0_6 = arith.constant 0 : index
    %10 = vector.load %arg2[%c512, %c0_6] : memref<896x128xbf16, #tpu.memory_space<vmem>>, vector<128x128xbf16>
    %cst_7 = arith.constant dense<0.000000e+00> : vector<8x128xf32>
    %11 = tpu.matmul %9, %10, %cst_7 {dimension_numbers = #tpu.dot_dimension_numbers<[1], [0], [0], [1], [0, 0, 1, 1], [], []>} : vector<8x128xbf16>, vector<128x128xbf16>, vector<8x128xf32> -> vector<8x128xf32>
    %c1 = arith.constant 1 : index
    %c0_8 = arith.constant 0 : index
    %12 = vector.load %arg3[%c1, %c0_8] : memref<8x128xf32, #tpu.memory_space<vmem>>, vector<1x128xf32>
    %13 = vector.broadcast %12 : vector<1x128xf32> to vector<8x128xf32>
    %14 = arith.addf %11, %13 : vector<8x128xf32>
    %cst_9 = arith.constant 0.000000e+00 : f32
    %15 = vector.broadcast %cst_9 : f32 to vector<8x128xf32>
    %16 = arith.maximumf %14, %15 : vector<8x128xf32>
    %17 = arith.truncf %16 : vector<8x128xf32> to vector<8x128xbf16>
    %c640 = arith.constant 640 : index
    %c0_10 = arith.constant 0 : index
    %18 = vector.load %arg2[%c640, %c0_10] : memref<896x128xbf16, #tpu.memory_space<vmem>>, vector<128x128xbf16>
    %cst_11 = arith.constant dense<0.000000e+00> : vector<8x128xf32>
    %19 = tpu.matmul %17, %18, %cst_11 {dimension_numbers = #tpu.dot_dimension_numbers<[1], [0], [0], [1], [0, 0, 1, 1], [], []>} : vector<8x128xbf16>, vector<128x128xbf16>, vector<8x128xf32> -> vector<8x128xf32>
    %c2 = arith.constant 2 : index
    %c0_12 = arith.constant 0 : index
    %20 = vector.load %arg3[%c2, %c0_12] : memref<8x128xf32, #tpu.memory_space<vmem>>, vector<1x128xf32>
    %21 = vector.broadcast %20 : vector<1x128xf32> to vector<8x128xf32>
    %22 = arith.addf %19, %21 : vector<8x128xf32>
    %cst_13 = arith.constant 0.000000e+00 : f32
    %23 = vector.broadcast %cst_13 : f32 to vector<8x128xf32>
    %24 = arith.maximumf %22, %23 : vector<8x128xf32>
    %25 = arith.truncf %24 : vector<8x128xf32> to vector<8x128xbf16>
    %c768 = arith.constant 768 : index
    %c0_14 = arith.constant 0 : index
    %26 = vector.load %arg2[%c768, %c0_14] : memref<896x128xbf16, #tpu.memory_space<vmem>>, vector<128x128xbf16>
    %cst_15 = arith.constant dense<0.000000e+00> : vector<8x128xf32>
    %27 = tpu.matmul %25, %26, %cst_15 {dimension_numbers = #tpu.dot_dimension_numbers<[1], [0], [0], [1], [0, 0, 1, 1], [], []>} : vector<8x128xbf16>, vector<128x128xbf16>, vector<8x128xf32> -> vector<8x128xf32>
    %c3 = arith.constant 3 : index
    %c0_16 = arith.constant 0 : index
    %28 = vector.load %arg3[%c3, %c0_16] : memref<8x128xf32, #tpu.memory_space<vmem>>, vector<1x128xf32>
    %29 = vector.broadcast %28 : vector<1x128xf32> to vector<8x128xf32>
    %30 = arith.addf %27, %29 : vector<8x128xf32>
    %cst_17 = arith.constant 0.000000e+00 : f32
    %31 = vector.broadcast %cst_17 : f32 to vector<8x128xf32>
    %32 = arith.maximumf %30, %31 : vector<8x128xf32>
    %c4 = arith.constant 4 : index
    %c0_18 = arith.constant 0 : index
    %33 = vector.load %arg3[%c4, %c0_18] : memref<8x128xf32, #tpu.memory_space<vmem>>, vector<1x128xf32>
    %34 = arith.truncf %33 : vector<1x128xf32> to vector<1x128xbf16>
    %35 = arith.truncf %32 : vector<8x128xf32> to vector<8x128xbf16>
    %cst_19 = arith.constant dense<0.000000e+00> : vector<1x8xf32>
    %36 = tpu.matmul %34, %35, %cst_19 {dimension_numbers = #tpu.dot_dimension_numbers<[1], [1], [0], [0], [0, 0, 1, 0], [], []>} : vector<1x128xbf16>, vector<8x128xbf16>, vector<1x8xf32> -> vector<1x8xf32>
    %c5 = arith.constant 5 : index
    %c0_20 = arith.constant 0 : index
    %37 = vector.load %arg3[%c5, %c0_20] : memref<8x128xf32, #tpu.memory_space<vmem>>, vector<1x1xf32>
    %38 = vector.broadcast %37 : vector<1x1xf32> to vector<1x8xf32>
    %39 = arith.addf %36, %38 : vector<1x8xf32>
    %40 = arith.negf %39 : vector<1x8xf32>
    %41 = math.exp %40 : vector<1x8xf32>
    %cst_21 = arith.constant 1.000000e+00 : f32
    %42 = vector.broadcast %cst_21 : f32 to vector<1x8xf32>
    %43 = arith.addf %42, %41 : vector<1x8xf32>
    %44 = arith.divf %42, %43 : vector<1x8xf32>
    %cst_22 = arith.constant 6.000000e+00 : f32
    %45 = vector.broadcast %cst_22 : f32 to vector<1x8xf32>
    %46 = arith.mulf %45, %44 : vector<1x8xf32>
    %47 = vector.shape_cast %46 : vector<1x8xf32> to vector<1x1x8xf32>
    %c0_23 = arith.constant 0 : index
    %c0_24 = arith.constant 0 : index
    %c0_25 = arith.constant 0 : index
    %48 = vector.load %arg4[%c0_23, %c0_24, %c0_25] : memref<1x1x8xf32, #tpu.memory_space<vmem>>, vector<1x1x8xf32>
    tpu.vector_store %arg4[%c0_23, %c0_24, %c0_25], %47 {strides = array<i32>} : memref<1x1x8xf32, #tpu.memory_space<vmem>>, vector<1x1x8xf32>,
    return
  }
  func.func @transform_0(%arg0: i32) -> (i32, i32) {
    %c0_i32 = arith.constant 0 : i32
    %c0_i32_0 = arith.constant 0 : i32
    return %arg0, %c0_i32 : i32, i32
  }
  func.func @transform_1(%arg0: i32) -> (i32, i32) {
    %c0_i32 = arith.constant 0 : i32
    %c0_i32_0 = arith.constant 0 : i32
    %c0_i32_1 = arith.constant 0 : i32
    return %c0_i32, %c0_i32_0 : i32, i32
  }
  func.func @transform_2(%arg0: i32) -> (i32, i32) {
    %c0_i32 = arith.constant 0 : i32
    %c0_i32_0 = arith.constant 0 : i32
    %c0_i32_1 = arith.constant 0 : i32
    return %c0_i32, %c0_i32_0 : i32, i32
  }
  func.func @transform_3(%arg0: i32) -> (i32, i32, i32) {
    %c0_i32 = arith.constant 0 : i32
    %c0_i32_0 = arith.constant 0 : i32
    %c0_i32_1 = arith.constant 0 : i32
    return %arg0, %c0_i32, %c0_i32_0 : i32, i32, i32
  }
}

</mosaic_0001>

<llo_original>
// kernel: tpu_custom_call.1
$region0: #{tpu_custom_call.1}
  #allocation0 [shape = 'u32[]', space=smem, size = 0x4, offset = 0x4, fixed_abs, tag = 'smem constant byte address 0x4 - core index']
  #allocation1 [shape = 'u32[144,128]{1,0:T(1,128)}', space=vmem, size = 0x12000, scoped, tag = 'internal scratch']
  %s0 = inlined_call_operand.hbm [shape: f32[8,512], index: 0, kind: input, shape index: {}]
  %s1 = inlined_call_operand.hbm [shape: bf16[896,128], index: 1, kind: input, shape index: {}]
  %s2 = inlined_call_operand.hbm [shape: f32[8,128], index: 2, kind: input, shape index: {}]
  %s3 = inlined_call_operand.hbm [shape: f32[1,1,8], index: 3, kind: output, shape index: {}]
  %s4 = sld [smem:[#allocation0]]
  $region34: #{tpu_custom_call.1} parent=0
    _
  %s6 = ssub.s32 1, %s4
  %s7 = scalar_select 0, %s6, %s4
  $region1: #{tpu_custom_call.1} parent=0
    #allocation2 [shape = 'u8[16384]{0}', space=vmem, size = 0x4000, scoped, tag = 'input window, operand 0, single buffered']
    #allocation3 [shape = 's32[1]{0}', space=sflag, size = 0x4, scoped, tag = 'scoped memory for tpu_custom_call.1']
    #allocation4 [shape = 's32[1]{0}', space=sflag, size = 0x4, scoped, tag = 'scoped memory for tpu_custom_call.1']
    #allocation5 [shape = 'u8[229376]{0}', space=vmem, size = 0x38000, scoped, tag = 'input window, operand 1, single buffered']
    #allocation6 [shape = 's32[1]{0}', space=sflag, size = 0x4, scoped, tag = 'scoped memory for tpu_custom_call.1']
    #allocation7 [shape = 'u8[4096]{0}', space=vmem, size = 0x1000, scoped, tag = 'input window, operand 2, single buffered']
    #allocation8 [shape = 'u8[512]{0}', space=vmem, size = 0x400, scoped, tag = 'output window, operand 0, single buffered']
    %8 = vsyncpa [#allocation3], 0
    %9 = vsyncpa [#allocation6], 0
    %10 = vsyncpa [#allocation4], 0
    // Predicated region
    $region2: #{tpu_custom_call.1} parent=1 // pred_check
      _
    $region3: #{tpu_custom_call.1} parent=1 // pred_check_branch
      %12 = sbr.rel (0) target = $region5
    $region4: #{tpu_custom_call.1} parent=1 // pred_region
      %s14 = ssub.s32 512, 512
      %15 = vsyncadd [#allocation3], %s14
      %s17 = sshll.u32 [#allocation2], 4
      %s18 = int_to_ptr.vmem [resolvable:$true] %s17
      %20 = dma.hbm_to_vmem [thread:$0]  %s0, 512, %s18, [#allocation3]
    $region5: #{tpu_custom_call.1} parent=1 // pred_fallthru
      _
    // Predicated region
    $region6: #{tpu_custom_call.1} parent=1 // pred_check
      _
    $region7: #{tpu_custom_call.1} parent=1 // pred_check_branch
      %22 = sbr.rel (0) target = $region9
    $region8: #{tpu_custom_call.1} parent=1 // pred_region
      %s24 = ssub.s32 7168, 7168
      %25 = vsyncadd [#allocation6], %s24
      %s26 = sshll.u32 [#allocation5], 4
      %s27 = int_to_ptr.vmem [resolvable:$true] %s26
      %32 = dma.hbm_to_vmem [thread:$0]  %s1, 7168, %s27, [#allocation6], 64, 64, 4
    $region9: #{tpu_custom_call.1} parent=1 // pred_fallthru
      _
    // Predicated region
    $region10: #{tpu_custom_call.1} parent=1 // pred_check
      _
    $region11: #{tpu_custom_call.1} parent=1 // pred_check_branch
      %34 = sbr.rel (0) target = $region13
    $region12: #{tpu_custom_call.1} parent=1 // pred_region
      %s36 = ssub.s32 128, 128
      %37 = vsyncadd [#allocation6], %s36
      %s39 = sshll.u32 [#allocation7], 4
      %s40 = int_to_ptr.vmem [resolvable:$true] %s39
      %42 = dma.hbm_to_vmem [thread:$0]  %s2, 128, %s40, [#allocation6]
    $region13: #{tpu_custom_call.1} parent=1 // pred_fallthru
      _
    // Predicated region
    $region14: #{tpu_custom_call.1} parent=1 // pred_check
      _
    $region15: #{tpu_custom_call.1} parent=1 // pred_check_branch
      %44 = sbr.rel (0) target = $region17
    $region16: #{tpu_custom_call.1} parent=1 // pred_region
      %45 = dma.done [#allocation3], 512
    $region17: #{tpu_custom_call.1} parent=1 // pred_fallthru
      _
    // Predicated region
    $region18: #{tpu_custom_call.1} parent=1 // pred_check
      _
    $region19: #{tpu_custom_call.1} parent=1 // pred_check_branch
      %47 = sbr.rel (0) target = $region21
    $region20: #{tpu_custom_call.1} parent=1 // pred_region
      %48 = dma.done [#allocation6], 7168
    $region21: #{tpu_custom_call.1} parent=1 // pred_fallthru
      _
    // Predicated region
    $region22: #{tpu_custom_call.1} parent=1 // pred_check
      _
    $region23: #{tpu_custom_call.1} parent=1 // pred_check_branch
      %50 = sbr.rel (0) target = $region25
    $region24: #{tpu_custom_call.1} parent=1 // pred_region
      %51 = dma.done [#allocation6], 128
    $region25: #{tpu_custom_call.1} parent=1 // pred_fallthru
      _
    %v53 = vld [vmem:[#allocation2] sm:$0xff]
    %v54 = vld [vmem:[#allocation2 + $0x8] sm:$0xff]
    %v55 = vld [vmem:[#allocation2 + $0x10] sm:$0xff]
    %v56 = vld [vmem:[#allocation2 + $0x18] sm:$0xff]
    %v57 = vpack.c.bf16 %v53, %v53
    %v58 = vpack.c.bf16 %v54, %v54
    %v59 = vpack.c.bf16 %v55, %v55
    %v60 = vpack.c.bf16 %v56, %v56
    %v61 = vld [vmem:[#allocation5] sm:$0xf]
    %v62 = vld [vmem:[#allocation5 + $0x4] sm:$0xf]
    %v63 = vld [vmem:[#allocation5 + $0x8] sm:$0xf]
    %v64 = vld [vmem:[#allocation5 + $0xc] sm:$0xf]
    %v65 = vld [vmem:[#allocation5 + $0x10] sm:$0xf]
    %v66 = vld [vmem:[#allocation5 + $0x14] sm:$0xf]
    %v67 = vld [vmem:[#allocation5 + $0x18] sm:$0xf]
    %v68 = vld [vmem:[#allocation5 + $0x1c] sm:$0xf]
    %v69 = vld [vmem:[#allocation5 + $0x20] sm:$0xf]
    %v70 = vld [vmem:[#allocation5 + $0x24] sm:$0xf]
    %v71 = vld [vmem:[#allocation5 + $0x28] sm:$0xf]
    %v72 = vld [vmem:[#allocation5 + $0x2c] sm:$0xf]
    %v73 = vld [vmem:[#allocation5 + $0x30] sm:$0xf]
    %v74 = vld [vmem:[#allocation5 + $0x34] sm:$0xf]
    %v75 = vld [vmem:[#allocation5 + $0x38] sm:$0xf]
    %v76 = vld [vmem:[#allocation5 + $0x3c] sm:$0xf]
    %v77 = vld [vmem:[#allocation5 + $0x40] sm:$0xf]
    %v78 = vld [vmem:[#allocation5 + $0x44] sm:$0xf]
    %v79 = vld [vmem:[#allocation5 + $0x48] sm:$0xf]
    %v80 = vld [vmem:[#allocation5 + $0x4c] sm:$0xf]
    %v81 = vld [vmem:[#allocation5 + $0x50] sm:$0xf]
    %v82 = vld [vmem:[#allocation5 + $0x54] sm:$0xf]
    %v83 = vld [vmem:[#allocation5 + $0x58] sm:$0xf]
    %v84 = vld [vmem:[#allocation5 + $0x5c] sm:$0xf]
    %v85 = vld [vmem:[#allocation5 + $0x60] sm:$0xf]
    %v86 = vld [vmem:[#allocation5 + $0x64] sm:$0xf]
    %v87 = vld [vmem:[#allocation5 + $0x68] sm:$0xf]
    %v88 = vld [vmem:[#allocation5 + $0x6c] sm:$0xf]
    %v89 = vld [vmem:[#allocation5 + $0x70] sm:$0xf]
    %v90 = vld [vmem:[#allocation5 + $0x74] sm:$0xf]
    %v91 = vld [vmem:[#allocation5 + $0x78] sm:$0xf]
    %v92 = vld [vmem:[#allocation5 + $0x7c] sm:$0xf]
    %v93 = vld [vmem:[#allocation5 + $0x80] sm:$0xf]
    %v94 = vld [vmem:[#allocation5 + $0x84] sm:$0xf]
    %v95 = vld [vmem:[#allocation5 + $0x88] sm:$0xf]
    %v96 = vld [vmem:[#allocation5 + $0x8c] sm:$0xf]
    %v97 = vld [vmem:[#allocation5 + $0x90] sm:$0xf]
    %v98 = vld [vmem:[#allocation5 + $0x94] sm:$0xf]
    %v99 = vld [vmem:[#allocation5 + $0x98] sm:$0xf]
    %v100 = vld [vmem:[#allocation5 + $0x9c] sm:$0xf]
    %v101 = vld [vmem:[#allocation5 + $0xa0] sm:$0xf]
    %v102 = vld [vmem:[#allocation5 + $0xa4] sm:$0xf]
    %v103 = vld [vmem:[#allocation5 + $0xa8] sm:$0xf]
    %v104 = vld [vmem:[#allocation5 + $0xac] sm:$0xf]
    %v105 = vld [vmem:[#allocation5 + $0xb0] sm:$0xf]
    %v106 = vld [vmem:[#allocation5 + $0xb4] sm:$0xf]
    %v107 = vld [vmem:[#allocation5 + $0xb8] sm:$0xf]
    %v108 = vld [vmem:[#allocation5 + $0xbc] sm:$0xf]
    %v109 = vld [vmem:[#allocation5 + $0xc0] sm:$0xf]
    %v110 = vld [vmem:[#allocation5 + $0xc4] sm:$0xf]
    %v111 = vld [vmem:[#allocation5 + $0xc8] sm:$0xf]
    %v112 = vld [vmem:[#allocation5 + $0xcc] sm:$0xf]
    %v113 = vld [vmem:[#allocation5 + $0xd0] sm:$0xf]
    %v114 = vld [vmem:[#allocation5 + $0xd4] sm:$0xf]
    %v115 = vld [vmem:[#allocation5 + $0xd8] sm:$0xf]
    %v116 = vld [vmem:[#allocation5 + $0xdc] sm:$0xf]
    %v117 = vld [vmem:[#allocation5 + $0xe0] sm:$0xf]
    %v118 = vld [vmem:[#allocation5 + $0xe4] sm:$0xf]
    %v119 = vld [vmem:[#allocation5 + $0xe8] sm:$0xf]
    %v120 = vld [vmem:[#allocation5 + $0xec] sm:$0xf]
    %v121 = vld [vmem:[#allocation5 + $0xf0] sm:$0xf]
    %v122 = vld [vmem:[#allocation5 + $0xf4] sm:$0xf]
    %v123 = vld [vmem:[#allocation5 + $0xf8] sm:$0xf]
    %v124 = vld [vmem:[#allocation5 + $0xfc] sm:$0xf]
    %v125 = vld [vmem:[#allocation7] sm:$0x1]
    %v126 = vlaneseq
    %v127 = vshrl.u32 %v126, 7
    %v128 = vsub.s32 0, %v127
    %v129 = vrot.slane %v125, %v128
    %v194 = vunpack.c.l.b16 %v61
    %v195 = vunpack.c.l.b16 %v62
    %v196 = vunpack.c.l.b16 %v63
    %v197 = vunpack.c.l.b16 %v64
    %v198 = vunpack.c.l.b16 %v65
    %v199 = vunpack.c.l.b16 %v66
    %v200 = vunpack.c.l.b16 %v67
    %v201 = vunpack.c.l.b16 %v68
    %v202 = vunpack.c.l.b16 %v69
    %v203 = vunpack.c.l.b16 %v70
    %v204 = vunpack.c.l.b16 %v71
    %v205 = vunpack.c.l.b16 %v72
    %v206 = vunpack.c.l.b16 %v73
    %v207 = vunpack.c.l.b16 %v74
    %v208 = vunpack.c.l.b16 %v75
    %v209 = vunpack.c.l.b16 %v76
    %v210 = vunpack.c.l.b16 %v77
    %v211 = vunpack.c.l.b16 %v78
    %v212 = vunpack.c.l.b16 %v79
    %v213 = vunpack.c.l.b16 %v80
    %v214 = vunpack.c.l.b16 %v81
    %v215 = vunpack.c.l.b16 %v82
    %v216 = vunpack.c.l.b16 %v83
    %v217 = vunpack.c.l.b16 %v84
    %v218 = vunpack.c.l.b16 %v85
    %v219 = vunpack.c.l.b16 %v86
    %v220 = vunpack.c.l.b16 %v87
    %v221 = vunpack.c.l.b16 %v88
    %v222 = vunpack.c.l.b16 %v89
    %v223 = vunpack.c.l.b16 %v90
    %v224 = vunpack.c.l.b16 %v91
    %v225 = vunpack.c.l.b16 %v92
    %v226 = vunpack.c.l.b16 %v93
    %v227 = vunpack.c.l.b16 %v94
    %v228 = vunpack.c.l.b16 %v95
    %v229 = vunpack.c.l.b16 %v96
    %v230 = vunpack.c.l.b16 %v97
    %v231 = vunpack.c.l.b16 %v98
    %v232 = vunpack.c.l.b16 %v99
    %v233 = vunpack.c.l.b16 %v100
    %v234 = vunpack.c.l.b16 %v101
    %v235 = vunpack.c.l.b16 %v102
    %v236 = vunpack.c.l.b16 %v103
    %v237 = vunpack.c.l.b16 %v104
    %v238 = vunpack.c.l.b16 %v105
    %v239 = vunpack.c.l.b16 %v106
    %v240 = vunpack.c.l.b16 %v107
    %v241 = vunpack.c.l.b16 %v108
    %v242 = vunpack.c.l.b16 %v109
    %v243 = vunpack.c.l.b16 %v110
    %v244 = vunpack.c.l.b16 %v111
    %v245 = vunpack.c.l.b16 %v112
    %v246 = vunpack.c.l.b16 %v113
    %v247 = vunpack.c.l.b16 %v114
    %v248 = vunpack.c.l.b16 %v115
    %v249 = vunpack.c.l.b16 %v116
    %v250 = vunpack.c.l.b16 %v117
    %v251 = vunpack.c.l.b16 %v118
    %v252 = vunpack.c.l.b16 %v119
    %v253 = vunpack.c.l.b16 %v120
    %v254 = vunpack.c.l.b16 %v121
    %v255 = vunpack.c.l.b16 %v122
    %v256 = vunpack.c.l.b16 %v123
    %v257 = vunpack.c.l.b16 %v124
    %v258 = vpack.c.b16 %v195, %v194
    %v259 = vpack.c.b16 %v197, %v196
    %v260 = vpack.c.b16 %v199, %v198
    %v261 = vpack.c.b16 %v201, %v200
    %v262 = vpack.c.b16 %v203, %v202
    %v263 = vpack.c.b16 %v205, %v204
    %v264 = vpack.c.b16 %v207, %v206
    %v265 = vpack.c.b16 %v209, %v208
    %v266 = vpack.c.b16 %v211, %v210
    %v267 = vpack.c.b16 %v213, %v212
    %v268 = vpack.c.b16 %v215, %v214
    %v269 = vpack.c.b16 %v217, %v216
    %v270 = vpack.c.b16 %v219, %v218
    %v271 = vpack.c.b16 %v221, %v220
    %v272 = vpack.c.b16 %v223, %v222
    %v273 = vpack.c.b16 %v225, %v224
    %v274 = vpack.c.b16 %v227, %v226
    %v275 = vpack.c.b16 %v229, %v228
    %v276 = vpack.c.b16 %v231, %v230
    %v277 = vpack.c.b16 %v233, %v232
    %v278 = vpack.c.b16 %v235, %v234
    %v279 = vpack.c.b16 %v237, %v236
    %v280 = vpack.c.b16 %v239, %v238
    %v281 = vpack.c.b16 %v241, %v240
    %v282 = vpack.c.b16 %v243, %v242
    %v283 = vpack.c.b16 %v245, %v244
    %v284 = vpack.c.b16 %v247, %v246
    %v285 = vpack.c.b16 %v249, %v248
    %v286 = vpack.c.b16 %v251, %v250
    %v287 = vpack.c.b16 %v253, %v252
    %v288 = vpack.c.b16 %v255, %v254
    %v289 = vpack.c.b16 %v257, %v256
    %322 = vmatprep.subr.bf16.mxu0 0
    %323 = vmatpush1.bf16.msra.mxu0 %v265
    %324 = vmatprep.subr.bf16.mxu0 0
    %325 = vmatpush1.bf16.msra.mxu0 %v264
    %326 = vmatprep.subr.bf16.mxu0 0
    %327 = vmatpush1.bf16.msra.mxu0 %v263
    %328 = vmatprep.subr.bf16.mxu0 0
    %329 = vmatpush1.bf16.msra.mxu0 %v262
    %330 = vmatprep.subr.bf16.mxu0 0
    %331 = vmatpush1.bf16.msra.mxu0 %v261
    %332 = vmatprep.subr.bf16.mxu0 0
    %333 = vmatpush1.bf16.msra.mxu0 %v260
    %334 = vmatprep.subr.bf16.mxu0 0
    %335 = vmatpush1.bf16.msra.mxu0 %v259
    %336 = vmatprep.subr.bf16.mxu0 0
    %337 = vmatpush1.bf16.msra.mxu0 %v258
    %338 = vmatprep.subr.bf16.mxu0 0
    %339 = vmatpush2.bf16.msra.mxu0 %v273
    %340 = vmatprep.subr.bf16.mxu0 0
    %341 = vmatpush2.bf16.msra.mxu0 %v272
    %342 = vmatprep.subr.bf16.mxu0 0
    %343 = vmatpush2.bf16.msra.mxu0 %v271
    %344 = vmatprep.subr.bf16.mxu0 0
    %345 = vmatpush2.bf16.msra.mxu0 %v270
    %346 = vmatprep.subr.bf16.mxu0 0
    %347 = vmatpush2.bf16.msra.mxu0 %v269
    %348 = vmatprep.subr.bf16.mxu0 0
    %349 = vmatpush2.bf16.msra.mxu0 %v268
    %350 = vmatprep.subr.bf16.mxu0 0
    %351 = vmatpush2.bf16.msra.mxu0 %v267
    %352 = vmatprep.subr.bf16.mxu0 0
    %353 = vmatpush2.bf16.msra.mxu0 %v266
    %354 = vmatprep.mubr.bf16.mxu0 %v58
    %355 = vmatmul.mubr.bf16.gmra.mxu0 %v57
    %v356 = vpop.f32.mrf.mxu0
    %v357 = vadd.f32 %v129, %v356
    %v358 = vpop.f32.mrf.mxu0
    %v359 = vpop.f32.mrf.mxu0
    %v360 = vpop.f32.mrf.mxu0
    %361 = vdwg.mxu0
    %362 = vmatprep.subr.bf16.mxu0 0
    %363 = vmatpush1.bf16.msra.mxu0 %v281
    %364 = vmatprep.subr.bf16.mxu0 0
    %365 = vmatpush1.bf16.msra.mxu0 %v280
    %366 = vmatprep.subr.bf16.mxu0 0
    %367 = vmatpush1.bf16.msra.mxu0 %v279
    %368 = vmatprep.subr.bf16.mxu0 0
    %369 = vmatpush1.bf16.msra.mxu0 %v278
    %370 = vmatprep.subr.bf16.mxu0 0
    %371 = vmatpush1.bf16.msra.mxu0 %v277
    %372 = vmatprep.subr.bf16.mxu0 0
    %373 = vmatpush1.bf16.msra.mxu0 %v276
    %374 = vmatprep.subr.bf16.mxu0 0
    %375 = vmatpush1.bf16.msra.mxu0 %v275
    %376 = vmatprep.subr.bf16.mxu0 0
    %377 = vmatpush1.bf16.msra.mxu0 %v274
    %378 = vmatprep.subr.bf16.mxu0 0
    %379 = vmatpush2.bf16.msra.mxu0 %v289
    %380 = vmatprep.subr.bf16.mxu0 0
    %381 = vmatpush2.bf16.msra.mxu0 %v288
    %382 = vmatprep.subr.bf16.mxu0 0
    %383 = vmatpush2.bf16.msra.mxu0 %v287
    %384 = vmatprep.subr.bf16.mxu0 0
    %385 = vmatpush2.bf16.msra.mxu0 %v286
    %386 = vmatprep.subr.bf16.mxu0 0
    %387 = vmatpush2.bf16.msra.mxu0 %v285
    %388 = vmatprep.subr.bf16.mxu0 0
    %389 = vmatpush2.bf16.msra.mxu0 %v284
    %390 = vmatprep.subr.bf16.mxu0 0
    %391 = vmatpush2.bf16.msra.mxu0 %v283
    %392 = vmatprep.subr.bf16.mxu0 0
    %393 = vmatpush2.bf16.msra.mxu0 %v282
    %394 = vmatprep.mubr.bf16.mxu0 %v60
    %395 = vmatmul.mubr.bf16.gmra.mxu0 %v59
    %v396 = vpop.f32.mrf.mxu0
    %v397 = vadd.f32 %v357, %v396
    %v398 = vpop.f32.mrf.mxu0
    %v399 = vpop.f32.mrf.mxu0
    %v400 = vpop.f32.mrf.mxu0
    %401 = vdwg.mxu0
    %v402 = vmax.f32 %v397, 0.0
    %v403 = vpack.c.bf16 %v402, %v402
    %v404 = vld [vmem:[#allocation5 + $0x100] sm:$0xf]
    %v405 = vld [vmem:[#allocation5 + $0x104] sm:$0xf]
    %v406 = vld [vmem:[#allocation5 + $0x108] sm:$0xf]
    %v407 = vld [vmem:[#allocation5 + $0x10c] sm:$0xf]
    %v408 = vld [vmem:[#allocation5 + $0x110] sm:$0xf]
    %v409 = vld [vmem:[#allocation5 + $0x114] sm:$0xf]
    %v410 = vld [vmem:[#allocation5 + $0x118] sm:$0xf]
    %v411 = vld [vmem:[#allocation5 + $0x11c] sm:$0xf]
    %v412 = vld [vmem:[#allocation5 + $0x120] sm:$0xf]
    %v413 = vld [vmem:[#allocation5 + $0x124] sm:$0xf]
    %v414 = vld [vmem:[#allocation5 + $0x128] sm:$0xf]
    %v415 = vld [vmem:[#allocation5 + $0x12c] sm:$0xf]
    %v416 = vld [vmem:[#allocation5 + $0x130] sm:$0xf]
    %v417 = vld [vmem:[#allocation5 + $0x134] sm:$0xf]
    %v418 = vld [vmem:[#allocation5 + $0x138] sm:$0xf]
    %v419 = vld [vmem:[#allocation5 + $0x13c] sm:$0xf]
    %v420 = vld [vmem:[#allocation7 + $0x1] sm:$0x1]
    %v421 = vlaneseq
    %v422 = vshrl.u32 %v421, 7
    %v423 = vsub.s32 0, %v422
    %v424 = vrot.slane %v420, %v423
    %v441 = vunpack.c.l.b16 %v404
    %v442 = vunpack.c.l.b16 %v405
    %v443 = vunpack.c.l.b16 %v406
    %v444 = vunpack.c.l.b16 %v407
    %v445 = vunpack.c.l.b16 %v408
    %v446 = vunpack.c.l.b16 %v409
    %v447 = vunpack.c.l.b16 %v410
    %v448 = vunpack.c.l.b16 %v411
    %v449 = vunpack.c.l.b16 %v412
    %v450 = vunpack.c.l.b16 %v413
    %v451 = vunpack.c.l.b16 %v414
    %v452 = vunpack.c.l.b16 %v415
    %v453 = vunpack.c.l.b16 %v416
    %v454 = vunpack.c.l.b16 %v417
    %v455 = vunpack.c.l.b16 %v418
    %v456 = vunpack.c.l.b16 %v419
    %v457 = vpack.c.b16 %v442, %v441
    %v458 = vpack.c.b16 %v444, %v443
    %v459 = vpack.c.b16 %v446, %v445
    %v460 = vpack.c.b16 %v448, %v447
    %v461 = vpack.c.b16 %v450, %v449
    %v462 = vpack.c.b16 %v452, %v451
    %v463 = vpack.c.b16 %v454, %v453
    %v464 = vpack.c.b16 %v456, %v455
    %473 = vmatprep.subr.bf16.mxu0 0
    %474 = vmatpush1.bf16.msra.mxu0 %v464
    %475 = vmatprep.subr.bf16.mxu0 0
    %476 = vmatpush1.bf16.msra.mxu0 %v463
    %477 = vmatprep.subr.bf16.mxu0 0
    %478 = vmatpush1.bf16.msra.mxu0 %v462
    %479 = vmatprep.subr.bf16.mxu0 0
    %480 = vmatpush1.bf16.msra.mxu0 %v461
    %481 = vmatprep.subr.bf16.mxu0 0
    %482 = vmatpush1.bf16.msra.mxu0 %v460
    %483 = vmatprep.subr.bf16.mxu0 0
    %484 = vmatpush1.bf16.msra.mxu0 %v459
    %485 = vmatprep.subr.bf16.mxu0 0
    %486 = vmatpush1.bf16.msra.mxu0 %v458
    %487 = vmatprep.subr.bf16.mxu0 0
    %488 = vmatpush1.bf16.msra.mxu0 %v457
    %489 = vmatprep.subr.bf16.mxu0 0
    %490 = vmatpush2.bf16.msra.mxu0 0
    %491 = vmatprep.subr.bf16.mxu0 0
    %492 = vmatpush2.bf16.msra.mxu0 0
    %493 = vmatprep.subr.bf16.mxu0 0
    %494 = vmatpush2.bf16.msra.mxu0 0
    %495 = vmatprep.subr.bf16.mxu0 0
    %496 = vmatpush2.bf16.msra.mxu0 0
    %497 = vmatprep.subr.bf16.mxu0 0
    %498 = vmatpush2.bf16.msra.mxu0 0
    %499 = vmatprep.subr.bf16.mxu0 0
    %500 = vmatpush2.bf16.msra.mxu0 0
    %501 = vmatprep.subr.bf16.mxu0 0
    %502 = vmatpush2.bf16.msra.mxu0 0
    %503 = vmatprep.subr.bf16.mxu0 0
    %504 = vmatpush2.bf16.msra.mxu0 0
    %505 = vmatprep.mubr.bf16.mxu0 0
    %506 = vmatmul.mubr.bf16.gmra.mxu0 %v403
    %v507 = vpop.f32.mrf.mxu0
    %v508 = vadd.f32 %v424, %v507
    %v509 = vpop.f32.mrf.mxu0
    %v510 = vpop.f32.mrf.mxu0
    %v511 = vpop.f32.mrf.mxu0
    %512 = vdwg.mxu0
    %v513 = vmax.f32 %v508, 0.0
    %v514 = vpack.c.bf16 %v513, %v513
    %v515 = vld [vmem:[#allocation5 + $0x140] sm:$0xf]
    %v516 = vld [vmem:[#allocation5 + $0x144] sm:$0xf]
    %v517 = vld [vmem:[#allocation5 + $0x148] sm:$0xf]
    %v518 = vld [vmem:[#allocation5 + $0x14c] sm:$0xf]
    %v519 = vld [vmem:[#allocation5 + $0x150] sm:$0xf]
    %v520 = vld [vmem:[#allocation5 + $0x154] sm:$0xf]
    %v521 = vld [vmem:[#allocation5 + $0x158] sm:$0xf]
    %v522 = vld [vmem:[#allocation5 + $0x15c] sm:$0xf]
    %v523 = vld [vmem:[#allocation5 + $0x160] sm:$0xf]
    %v524 = vld [vmem:[#allocation5 + $0x164] sm:$0xf]
    %v525 = vld [vmem:[#allocation5 + $0x168] sm:$0xf]
    %v526 = vld [vmem:[#allocation5 + $0x16c] sm:$0xf]
    %v527 = vld [vmem:[#allocation5 + $0x170] sm:$0xf]
    %v528 = vld [vmem:[#allocation5 + $0x174] sm:$0xf]
    %v529 = vld [vmem:[#allocation5 + $0x178] sm:$0xf]
    %v530 = vld [vmem:[#allocation5 + $0x17c] sm:$0xf]
    %v531 = vld [vmem:[#allocation7 + $0x2] sm:$0x1]
    %v532 = vlaneseq
    %v533 = vshrl.u32 %v532, 7
    %v534 = vsub.s32 0, %v533
    %v535 = vrot.slane %v531, %v534
    %v552 = vunpack.c.l.b16 %v515
    %v553 = vunpack.c.l.b16 %v516
    %v554 = vunpack.c.l.b16 %v517
    %v555 = vunpack.c.l.b16 %v518
    %v556 = vunpack.c.l.b16 %v519
    %v557 = vunpack.c.l.b16 %v520
    %v558 = vunpack.c.l.b16 %v521
    %v559 = vunpack.c.l.b16 %v522
    %v560 = vunpack.c.l.b16 %v523
    %v561 = vunpack.c.l.b16 %v524
    %v562 = vunpack.c.l.b16 %v525
    %v563 = vunpack.c.l.b16 %v526
    %v564 = vunpack.c.l.b16 %v527
    %v565 = vunpack.c.l.b16 %v528
    %v566 = vunpack.c.l.b16 %v529
    %v567 = vunpack.c.l.b16 %v530
    %v568 = vpack.c.b16 %v553, %v552
    %v569 = vpack.c.b16 %v555, %v554
    %v570 = vpack.c.b16 %v557, %v556
    %v571 = vpack.c.b16 %v559, %v558
    %v572 = vpack.c.b16 %v561, %v560
    %v573 = vpack.c.b16 %v563, %v562
    %v574 = vpack.c.b16 %v565, %v564
    %v575 = vpack.c.b16 %v567, %v566
    %584 = vmatprep.subr.bf16.mxu0 0
    %585 = vmatpush1.bf16.msra.mxu0 %v575
    %586 = vmatprep.subr.bf16.mxu0 0
    %587 = vmatpush1.bf16.msra.mxu0 %v574
    %588 = vmatprep.subr.bf16.mxu0 0
    %589 = vmatpush1.bf16.msra.mxu0 %v573
    %590 = vmatprep.subr.bf16.mxu0 0
    %591 = vmatpush1.bf16.msra.mxu0 %v572
    %592 = vmatprep.subr.bf16.mxu0 0
    %593 = vmatpush1.bf16.msra.mxu0 %v571
    %594 = vmatprep.subr.bf16.mxu0 0
    %595 = vmatpush1.bf16.msra.mxu0 %v570
    %596 = vmatprep.subr.bf16.mxu0 0
    %597 = vmatpush1.bf16.msra.mxu0 %v569
    %598 = vmatprep.subr.bf16.mxu0 0
    %599 = vmatpush1.bf16.msra.mxu0 %v568
    %600 = vmatprep.subr.bf16.mxu0 0
    %601 = vmatpush2.bf16.msra.mxu0 0
    %602 = vmatprep.subr.bf16.mxu0 0
    %603 = vmatpush2.bf16.msra.mxu0 0
    %604 = vmatprep.subr.bf16.mxu0 0
    %605 = vmatpush2.bf16.msra.mxu0 0
    %606 = vmatprep.subr.bf16.mxu0 0
    %607 = vmatpush2.bf16.msra.mxu0 0
    %608 = vmatprep.subr.bf16.mxu0 0
    %609 = vmatpush2.bf16.msra.mxu0 0
    %610 = vmatprep.subr.bf16.mxu0 0
    %611 = vmatpush2.bf16.msra.mxu0 0
    %612 = vmatprep.subr.bf16.mxu0 0
    %613 = vmatpush2.bf16.msra.mxu0 0
    %614 = vmatprep.subr.bf16.mxu0 0
    %615 = vmatpush2.bf16.msra.mxu0 0
    %616 = vmatprep.mubr.bf16.mxu0 0
    %617 = vmatmul.mubr.bf16.gmra.mxu0 %v514
    %v618 = vpop.f32.mrf.mxu0
    %v619 = vadd.f32 %v535, %v618
    %v620 = vpop.f32.mrf.mxu0
    %v621 = vpop.f32.mrf.mxu0
    %v622 = vpop.f32.mrf.mxu0
    %623 = vdwg.mxu0
    %v624 = vmax.f32 %v619, 0.0
    %v625 = vpack.c.bf16 %v624, %v624
    %v626 = vld [vmem:[#allocation5 + $0x180] sm:$0xf]
    %v627 = vld [vmem:[#allocation5 + $0x184] sm:$0xf]
    %v628 = vld [vmem:[#allocation5 + $0x188] sm:$0xf]
    %v629 = vld [vmem:[#allocation5 + $0x18c] sm:$0xf]
    %v630 = vld [vmem:[#allocation5 + $0x190] sm:$0xf]
    %v631 = vld [vmem:[#allocation5 + $0x194] sm:$0xf]
    %v632 = vld [vmem:[#allocation5 + $0x198] sm:$0xf]
    %v633 = vld [vmem:[#allocation5 + $0x19c] sm:$0xf]
    %v634 = vld [vmem:[#allocation5 + $0x1a0] sm:$0xf]
    %v635 = vld [vmem:[#allocation5 + $0x1a4] sm:$0xf]
    %v636 = vld [vmem:[#allocation5 + $0x1a8] sm:$0xf]
    %v637 = vld [vmem:[#allocation5 + $0x1ac] sm:$0xf]
    %v638 = vld [vmem:[#allocation5 + $0x1b0] sm:$0xf]
    %v639 = vld [vmem:[#allocation5 + $0x1b4] sm:$0xf]
    %v640 = vld [vmem:[#allocation5 + $0x1b8] sm:$0xf]
    %v641 = vld [vmem:[#allocation5 + $0x1bc] sm:$0xf]
    %v642 = vld [vmem:[#allocation7 + $0x3] sm:$0x1]
    %v643 = vlaneseq
    %v644 = vshrl.u32 %v643, 7
    %v645 = vsub.s32 0, %v644
    %v646 = vrot.slane %v642, %v645
    %v663 = vunpack.c.l.b16 %v626
    %v664 = vunpack.c.l.b16 %v627
    %v665 = vunpack.c.l.b16 %v628
    %v666 = vunpack.c.l.b16 %v629
    %v667 = vunpack.c.l.b16 %v630
    %v668 = vunpack.c.l.b16 %v631
    %v669 = vunpack.c.l.b16 %v632
    %v670 = vunpack.c.l.b16 %v633
    %v671 = vunpack.c.l.b16 %v634
    %v672 = vunpack.c.l.b16 %v635
    %v673 = vunpack.c.l.b16 %v636
    %v674 = vunpack.c.l.b16 %v637
    %v675 = vunpack.c.l.b16 %v638
    %v676 = vunpack.c.l.b16 %v639
    %v677 = vunpack.c.l.b16 %v640
    %v678 = vunpack.c.l.b16 %v641
    %v679 = vpack.c.b16 %v664, %v663
    %v680 = vpack.c.b16 %v666, %v665
    %v681 = vpack.c.b16 %v668, %v667
    %v682 = vpack.c.b16 %v670, %v669
    %v683 = vpack.c.b16 %v672, %v671
    %v684 = vpack.c.b16 %v674, %v673
    %v685 = vpack.c.b16 %v676, %v675
    %v686 = vpack.c.b16 %v678, %v677
    %695 = vmatprep.subr.bf16.mxu0 0
    %696 = vmatpush1.bf16.msra.mxu0 %v686
    %697 = vmatprep.subr.bf16.mxu0 0
    %698 = vmatpush1.bf16.msra.mxu0 %v685
    %699 = vmatprep.subr.bf16.mxu0 0
    %700 = vmatpush1.bf16.msra.mxu0 %v684
    %701 = vmatprep.subr.bf16.mxu0 0
    %702 = vmatpush1.bf16.msra.mxu0 %v683
    %703 = vmatprep.subr.bf16.mxu0 0
    %704 = vmatpush1.bf16.msra.mxu0 %v682
    %705 = vmatprep.subr.bf16.mxu0 0
    %706 = vmatpush1.bf16.msra.mxu0 %v681
    %707 = vmatprep.subr.bf16.mxu0 0
    %708 = vmatpush1.bf16.msra.mxu0 %v680
    %709 = vmatprep.subr.bf16.mxu0 0
    %710 = vmatpush1.bf16.msra.mxu0 %v679
    %711 = vmatprep.subr.bf16.mxu0 0
    %712 = vmatpush2.bf16.msra.mxu0 0
    %713 = vmatprep.subr.bf16.mxu0 0
    %714 = vmatpush2.bf16.msra.mxu0 0
    %715 = vmatprep.subr.bf16.mxu0 0
    %716 = vmatpush2.bf16.msra.mxu0 0
    %717 = vmatprep.subr.bf16.mxu0 0
    %718 = vmatpush2.bf16.msra.mxu0 0
    %719 = vmatprep.subr.bf16.mxu0 0
    %720 = vmatpush2.bf16.msra.mxu0 0
    %721 = vmatprep.subr.bf16.mxu0 0
    %722 = vmatpush2.bf16.msra.mxu0 0
    %723 = vmatprep.subr.bf16.mxu0 0
    %724 = vmatpush2.bf16.msra.mxu0 0
    %725 = vmatprep.subr.bf16.mxu0 0
    %726 = vmatpush2.bf16.msra.mxu0 0
    %727 = vmatprep.mubr.bf16.mxu0 0
    %728 = vmatmul.mubr.bf16.gmra.mxu0 %v625
    %v729 = vpop.f32.mrf.mxu0
    %v730 = vadd.f32 %v646, %v729
    %v731 = vpop.f32.mrf.mxu0
    %v732 = vpop.f32.mrf.mxu0
    %v733 = vpop.f32.mrf.mxu0
    %734 = vdwg.mxu0
    %v735 = vmax.f32 %v730, 0.0
    %v736 = vld [vmem:[#allocation7 + $0x4] sm:$0x1]
    %v737 = vpack.c.bf16 %v736, %v736
    %v738 = vpack.c.bf16 %v735, %v735
    %v739 = vld [vmem:[#allocation7 + $0x5] sm:$0x1]
    %741 = vset.pattern.permute.xlu0 0
    %742 = vperm.xlu0 %741, %v739
    %v743 = vpop.permute.xlu0 %742
    %745 = vmatprep.subr.bf16.mxu0 0
    %746 = vmatpush1.bf16.xpose.msra.mxu0 0
    %747 = vmatprep.subr.bf16.mxu0 0
    %748 = vmatpush1.bf16.xpose.msra.mxu0 0
    %749 = vmatprep.subr.bf16.mxu0 0
    %750 = vmatpush1.bf16.xpose.msra.mxu0 0
    %751 = vmatprep.subr.bf16.mxu0 0
    %752 = vmatpush1.bf16.xpose.msra.mxu0 0
    %753 = vmatprep.subr.bf16.mxu0 0
    %754 = vmatpush1.bf16.xpose.msra.mxu0 0
    %755 = vmatprep.subr.bf16.mxu0 0
    %756 = vmatpush1.bf16.xpose.msra.mxu0 0
    %757 = vmatprep.subr.bf16.mxu0 0
    %758 = vmatpush1.bf16.xpose.msra.mxu0 0
    %759 = vmatprep.subr.bf16.mxu0 0
    %760 = vmatpush1.bf16.xpose.msra.mxu0 %v738
    %761 = vmatprep.subr.bf16.mxu0 0
    %762 = vmatpush2.bf16.xpose.msra.mxu0 0
    %763 = vmatprep.subr.bf16.mxu0 0
    %764 = vmatpush2.bf16.xpose.msra.mxu0 0
    %765 = vmatprep.subr.bf16.mxu0 0
    %766 = vmatpush2.bf16.xpose.msra.mxu0 0
    %767 = vmatprep.subr.bf16.mxu0 0
    %768 = vmatpush2.bf16.xpose.msra.mxu0 0
    %769 = vmatprep.subr.bf16.mxu0 0
    %770 = vmatpush2.bf16.xpose.msra.mxu0 0
    %771 = vmatprep.subr.bf16.mxu0 0
    %772 = vmatpush2.bf16.xpose.msra.mxu0 0
    %773 = vmatprep.subr.bf16.mxu0 0
    %774 = vmatpush2.bf16.xpose.msra.mxu0 0
    %775 = vmatprep.subr.bf16.mxu0 0
    %776 = vmatpush2.bf16.xpose.msra.mxu0 0
    %777 = vmatprep.mubr.bf16.mxu0 0
    %778 = vmatmul.mubr.bf16.gmra.mxu0 %v737
    %v779 = vpop.f32.mrf.mxu0
    %v780 = vadd.f32 %v743, %v779
    %v781 = vpop.f32.mrf.mxu0
    %v782 = vpop.f32.mrf.mxu0
    %v783 = vpop.f32.mrf.mxu0
    %784 = vdwg.mxu0
    %v785 = vxor.u32 %v780, 2147483648
    %v786 = vmul.f32 %v785, 1.442695
    %v787 = vpow.pop %v786
    %v788 = vadd.f32 %v787, 1.0
    %v789 = vrcp.pop %v788
    %v790 = vmul.f32 1.0, %v789
    %v791 = vmul.f32 %v790, 6.0
    %vm792 = vcmask 57344
    %793 = vst.msk [vmem:[#allocation8] sm:$0x1] %vm792, %v791
    // Predicated region
    $region26: #{tpu_custom_call.1} parent=1 // pred_check
      _
    $region27: #{tpu_custom_call.1} parent=1 // pred_check_branch
      %795 = sbr.rel (0) target = $region29
    $region28: #{tpu_custom_call.1} parent=1 // pred_region
      %s797 = ssub.s32 16, 16
      %798 = vsyncadd [#allocation4], %s797
      %s800 = sshll.u32 [#allocation8], 4
      %s801 = int_to_ptr.vmem [resolvable:$true] %s800
      %803 = dma.vmem_to_hbm [thread:$0]  %s801, 16, %s3, [#allocation4]
    $region29: #{tpu_custom_call.1} parent=1 // pred_fallthru
      _
    // Predicated region
    $region30: #{tpu_custom_call.1} parent=1 // pred_check
      _
    $region31: #{tpu_custom_call.1} parent=1 // pred_check_branch
      %805 = sbr.rel (0) target = $region33
    $region32: #{tpu_custom_call.1} parent=1 // pred_region
      %806 = dma.done [#allocation4], 16
    $region33: #{tpu_custom_call.1} parent=1 // pred_fallthru
      _
    %807 = vsyncpa [#allocation3], 1
    %808 = vsyncpa [#allocation6], 1
    %809 = vsyncpa [#allocation4], 1

</llo_original>
